<compile_context>
chip_gen: v7x
topology: tpu7x:2x2x1
jax: 0.10.0
libtpu: 0.0.40
codegen_flags: <defaults>
</compile_context>

<pallas_src>
import math

import jax
import jax.numpy as jnp
from jax import lax
from jax.experimental import pallas as pl
from jax.experimental.pallas import tpu as pltpu


def _round_up(x: int, m: int) -> int:
    return (x + m - 1) // m * m


def _backbone_update_kernel(x_ref, w_ref, b_ref, o_ref):
    # x_ref: (tile_rows, c_s)   w_ref: (6, c_s)   b_ref: (6, 1) f32
    # o_ref: (6, tile_rows)  -- lane-dense output (rows live on the lane axis)
    acc = lax.dot_general(
        w_ref[...],
        x_ref[...],
        dimension_numbers=(((1,), (1,)), ((), ())),   # contract over c_s -> (6, tile_rows)
        preferred_element_type=jnp.float32,
    )
    o_ref[...] = (acc + b_ref[...]).astype(o_ref.dtype)


def backbone_update(s, weight, bias, *, tile_rows: int = 1024):
    """BackboneUpdate forward.

    s:      (..., N_res, c_s) single representation
    weight: (6, c_s) torch Linear layout (out, in)
    bias:   (6,)
    returns (..., N_res, 6)
    """
    *batch_dims, n_res, c_s = s.shape
    out_dim = weight.shape[0]
    assert weight.shape == (out_dim, c_s), "weight must be (6, c_s)"

    rows = math.prod(batch_dims) * n_res
    x = s.reshape(rows, c_s)                               # metadata-only reshape
    w = weight.astype(s.dtype)                             # tiny (6, c_s)
    b2 = bias.reshape(out_dim, 1).astype(jnp.float32)      # tiny, pre-cast once

    # ---- Row tiling (no padding of x) -------------------------------------
    tile_rows = max(128, _round_up(min(tile_rows, rows), 128))
    # >= 4 grid steps (>= 2 per TensorCore on v7x megacore) whenever rows allow.
    if rows >= 4 * 128:
        tile_rows = min(tile_rows, _round_up(-(-rows // 4), 128))
    if rows <= tile_rows:
        # Single full-array block: full-dim block shapes are exempt from (8,128).
        tile_rows = rows
    grid = (-(-rows // tile_rows),)                        # cdiv; last block may be partial

    # ---- Tight VMEM reservation (actual footprint is a few MiB) ------------
    itemsize = x.dtype.itemsize
    x_tile_b = tile_rows * c_s * itemsize                  # input tile
    out_tile_b = 8 * tile_rows * 4                         # (6->8 sublane pad), f32 worst case
    w_b = 8 * c_s * 4 + 8 * 128 * 4                        # resident weight + bias (padded)
    footprint = 2 * (x_tile_b + out_tile_b) + 2 * w_b      # double-buffered
    vmem_limit = int(min(max(3 * footprint, 8 << 20), 32 << 20))

    cost = pl.CostEstimate(
        flops=2 * rows * c_s * out_dim,
        transcendentals=0,
        bytes_accessed=(rows * c_s * itemsize
                        + out_dim * c_s * itemsize
                        + rows * out_dim * s.dtype.itemsize),
    )

    out_t = pl.pallas_call(
        _backbone_update_kernel,
        out_shape=jax.ShapeDtypeStruct((out_dim, rows), s.dtype),
        grid_spec=pltpu.PrefetchScalarGridSpec(
            num_scalar_prefetch=0,
            grid=grid,
            in_specs=[
                pl.BlockSpec((tile_rows, c_s), lambda i: (i, 0)),   # x tile (rows on sublanes)
                pl.BlockSpec((out_dim, c_s), lambda i: (0, 0)),     # weight, resident in VMEM
                pl.BlockSpec((out_dim, 1), lambda i: (0, 0)),       # bias (f32), resident
            ],
            out_specs=pl.BlockSpec((out_dim, tile_rows), lambda i: (0, i)),  # lane-dense
        ),
        compiler_params=pltpu.CompilerParams(
            dimension_semantics=("parallel",),
            vmem_limit_bytes=vmem_limit,
        ),
        cost_estimate=cost,
    )(x, w, b2)

    # Tiny (6, rows) -> (rows, 6) transpose; negligible vs. the dominant x read.
    return jnp.transpose(out_t).reshape(*batch_dims, n_res, out_dim)


def reference(s, weight, bias):
    upd = jnp.einsum(
        "...ij,kj->...ik",
        s.astype(jnp.float32),
        weight.astype(jnp.float32),
        precision=jax.lax.Precision.HIGHEST,
    )
    return (upd + bias.astype(jnp.float32)).astype(s.dtype)


if __name__ == "__main__":
    # Small test shape; c_s is the real AlphaFold single-rep width (3*128, lane-dense).
    batch, n_res, c_s = 2, 8, 384

    key = jax.random.PRNGKey(0)
    k_s, k_w, k_b = jax.random.split(key, 3)

    s = jax.random.normal(k_s, (batch, n_res, c_s), dtype=jnp.float32)
    # NOTE: the real Linear uses init='final' (all-zero weights); use small random
    # parameters here so the correctness check is non-trivial.
    weight = (1.0 / c_s) ** 0.5 * jax.random.normal(k_w, (6, c_s), dtype=jnp.float32)
    bias = 0.01 * jax.random.normal(k_b, (6,), dtype=jnp.float32)

    out = backbone_update(s, weight, bias)
    out = jax.block_until_ready(out)

    ref = reference(s, weight, bias)
    assert out.shape == (batch, n_res, 6)
    assert jnp.allclose(out, ref, atol=1e-4, rtol=1e-4), "mismatch vs reference"

    print("KERNEL_OK")
</pallas_src>

<mosaic_0001>
module attributes {stable_mosaic.version = 11 : i64} {
  func.func @_backbone_update_kernel(%arg0: i32, %arg1: memref<16x384xf32, #tpu.memory_space<vmem>>, %arg2: memref<6x384xf32, #tpu.memory_space<vmem>>, %arg3: memref<6x1xf32, #tpu.memory_space<vmem>>, %arg4: memref<6x16xf32, #tpu.memory_space<vmem>>) attributes {dimension_semantics = [#tpu.dimension_semantics<parallel>], iteration_bounds = array<i64: 1>, scalar_prefetch = 0 : i64, scratch_operands = 0 : i64, tpu.core_type = #tpu.core_type<tc>, window_params = [{transform_indices = @transform_0, window_bounds = array<i64: 16, 384>}, {pipeline_mode = #tpu.pipeline_mode<synchronous>, transform_indices = @transform_1, window_bounds = array<i64: 6, 384>}, {pipeline_mode = #tpu.pipeline_mode<synchronous>, transform_indices = @transform_2, window_bounds = array<i64: 6, 1>}, {transform_indices = @transform_3, window_bounds = array<i64: 6, 16>}]} {
    %c0 = arith.constant 0 : index
    %c0_0 = arith.constant 0 : index
    %0 = vector.load %arg2[%c0, %c0_0] : memref<6x384xf32, #tpu.memory_space<vmem>>, vector<6x384xf32>
    %c0_1 = arith.constant 0 : index
    %c0_2 = arith.constant 0 : index
    %1 = vector.load %arg1[%c0_1, %c0_2] : memref<16x384xf32, #tpu.memory_space<vmem>>, vector<16x384xf32>
    %cst = arith.constant dense<0.000000e+00> : vector<6x16xf32>
    %2 = tpu.matmul %0, %1, %cst {dimension_numbers = #tpu.dot_dimension_numbers<[1], [1], [0], [0], [0, 0, 1, 0], [], []>} : vector<6x384xf32>, vector<16x384xf32>, vector<6x16xf32> -> vector<6x16xf32>
    %c0_3 = arith.constant 0 : index
    %c0_4 = arith.constant 0 : index
    %3 = vector.load %arg3[%c0_3, %c0_4] : memref<6x1xf32, #tpu.memory_space<vmem>>, vector<6x1xf32>
    %4 = vector.broadcast %3 : vector<6x1xf32> to vector<6x16xf32>
    %5 = arith.addf %2, %4 : vector<6x16xf32>
    %c0_5 = arith.constant 0 : index
    %c0_6 = arith.constant 0 : index
    %6 = vector.load %arg4[%c0_5, %c0_6] : memref<6x16xf32, #tpu.memory_space<vmem>>, vector<6x16xf32>
    tpu.vector_store %arg4[%c0_5, %c0_6], %5 {strides = array<i32>} : memref<6x16xf32, #tpu.memory_space<vmem>>, vector<6x16xf32>,
    return
  }
  func.func @transform_0(%arg0: i32) -> (i32, i32) {
    %c0_i32 = arith.constant 0 : i32
    %c0_i32_0 = arith.constant 0 : i32
    return %arg0, %c0_i32 : i32, i32
  }
  func.func @transform_1(%arg0: i32) -> (i32, i32) {
    %c0_i32 = arith.constant 0 : i32
    %c0_i32_0 = arith.constant 0 : i32
    %c0_i32_1 = arith.constant 0 : i32
    return %c0_i32, %c0_i32_0 : i32, i32
  }
  func.func @transform_2(%arg0: i32) -> (i32, i32) {
    %c0_i32 = arith.constant 0 : i32
    %c0_i32_0 = arith.constant 0 : i32
    %c0_i32_1 = arith.constant 0 : i32
    return %c0_i32, %c0_i32_0 : i32, i32
  }
  func.func @transform_3(%arg0: i32) -> (i32, i32) {
    %c0_i32 = arith.constant 0 : i32
    %c0_i32_0 = arith.constant 0 : i32
    return %c0_i32, %arg0 : i32, i32
  }
}

</mosaic_0001>

<llo_original>
// kernel: tpu_custom_call.1
$region0: #{tpu_custom_call.1}
  #allocation0 [shape = 'u32[]', space=smem, size = 0x4, offset = 0x4, fixed_abs, tag = 'smem constant byte address 0x4 - core index']
  #allocation1 [shape = 'u32[144,128]{1,0:T(1,128)}', space=vmem, size = 0x12000, scoped, tag = 'internal scratch']
  %s0 = inlined_call_operand.hbm [shape: f32[16,384], index: 0, kind: input, shape index: {}]
  %s1 = inlined_call_operand.hbm [shape: f32[6,384], index: 1, kind: input, shape index: {}]
  %s2 = inlined_call_operand.vmem [shape: f32[6,1], index: 2, kind: input, shape index: {}]
  %s3 = inlined_call_operand.hbm [shape: f32[6,16], index: 3, kind: output, shape index: {}]
  %s4 = sld [smem:[#allocation0]]
  $region30: #{tpu_custom_call.1} parent=0
    _
  %s6 = ssub.s32 1, %s4
  %s7 = scalar_select 0, %s6, %s4
  $region1: #{tpu_custom_call.1} parent=0
    #allocation2 [shape = 'u8[24576]{0}', space=vmem, size = 0x6000, scoped, tag = 'input window, operand 0, single buffered']
    #allocation3 [shape = 's32[1]{0}', space=sflag, size = 0x4, scoped, tag = 'scoped memory for tpu_custom_call.1']
    #allocation4 [shape = 's32[1]{0}', space=sflag, size = 0x4, scoped, tag = 'scoped memory for tpu_custom_call.1']
    #allocation5 [shape = 'u8[12288]{0}', space=vmem, size = 0x3000, scoped, tag = 'input window, operand 1, single buffered']
    #allocation6 [shape = 's32[1]{0}', space=sflag, size = 0x4, scoped, tag = 'scoped memory for tpu_custom_call.1']
    #allocation7 [shape = 'u8[4096]{0}', space=vmem, size = 0x1000, scoped, tag = 'output window, operand 0, single buffered']
    %8 = vsyncpa [#allocation3], 0
    %9 = vsyncpa [#allocation6], 0
    %10 = vsyncpa [#allocation4], 0
    // Predicated region
    $region2: #{tpu_custom_call.1} parent=1 // pred_check
      _
    $region3: #{tpu_custom_call.1} parent=1 // pred_check_branch
      %12 = sbr.rel (0) target = $region5
    $region4: #{tpu_custom_call.1} parent=1 // pred_region
      %s14 = ssub.s32 768, 768
      %15 = vsyncadd [#allocation3], %s14
      %s16 = sshll.u32 [#allocation2], 4
      %s17 = int_to_ptr.vmem [resolvable:$true] %s16
      %22 = dma.hbm_to_vmem [thread:$0]  %s0, 768, %s17, [#allocation3], 384, 384, 24
    $region5: #{tpu_custom_call.1} parent=1 // pred_fallthru
      _
    // Predicated region
    $region6: #{tpu_custom_call.1} parent=1 // pred_check
      _
    $region7: #{tpu_custom_call.1} parent=1 // pred_check_branch
      %24 = sbr.rel (0) target = $region9
    $region8: #{tpu_custom_call.1} parent=1 // pred_region
      %s26 = ssub.s32 384, 384
      %27 = vsyncadd [#allocation6], %s26
      %s29 = sshll.u32 [#allocation5], 4
      %s30 = int_to_ptr.vmem [resolvable:$true] %s29
      %32 = dma.hbm_to_vmem [thread:$0]  %s1, 384, %s30, [#allocation6]
    $region9: #{tpu_custom_call.1} parent=1 // pred_fallthru
      _
    // Predicated region
    $region10: #{tpu_custom_call.1} parent=1 // pred_check
      _
    $region11: #{tpu_custom_call.1} parent=1 // pred_check_branch
      %34 = sbr.rel (0) target = $region13
    $region12: #{tpu_custom_call.1} parent=1 // pred_region
      _
    $region13: #{tpu_custom_call.1} parent=1 // pred_fallthru
      _
    // Predicated region
    $region14: #{tpu_custom_call.1} parent=1 // pred_check
      _
    $region15: #{tpu_custom_call.1} parent=1 // pred_check_branch
      %36 = sbr.rel (0) target = $region17
    $region16: #{tpu_custom_call.1} parent=1 // pred_region
      %37 = dma.done [#allocation3], 768
    $region17: #{tpu_custom_call.1} parent=1 // pred_fallthru
      _
    // Predicated region
    $region18: #{tpu_custom_call.1} parent=1 // pred_check
      _
    $region19: #{tpu_custom_call.1} parent=1 // pred_check_branch
      %39 = sbr.rel (0) target = $region21
    $region20: #{tpu_custom_call.1} parent=1 // pred_region
      %40 = dma.done [#allocation6], 384
    $region21: #{tpu_custom_call.1} parent=1 // pred_fallthru
      _
    %v41 = vld [vmem:[#allocation5] sm:$0x3f]
    %v42 = vld [vmem:[#allocation5 + $0x8] sm:$0x3f]
    %v43 = vld [vmem:[#allocation5 + $0x10] sm:$0x3f]
    %v44 = vld [vmem:[#allocation2] sm:$0xff]
    %v45 = vld [vmem:[#allocation2 + $0x8] sm:$0xff]
    %v46 = vld [vmem:[#allocation2 + $0x10] sm:$0xff]
    %v47 = vld [vmem:[#allocation2 + $0x18] sm:$0xff]
    %v48 = vld [vmem:[#allocation2 + $0x20] sm:$0xff]
    %v49 = vld [vmem:[#allocation2 + $0x28] sm:$0xff]
    %v50 = vld [vmem:[%s2] sm:$0x3f]
    %52 = vset.pattern.permute.xlu0 0
    %53 = vperm.xlu0 %52, %v50
    %v54 = vpop.permute.xlu0 %53
    %56 = vmatprep.subr.mxu0 %v45
    %57 = vmatpush1.xpose.msra.mxu0 %v44
    %58 = vmatprep.subr.mxu0 %v48
    %59 = vmatpush1.xpose.msra.mxu0 %v47
    %60 = vmatprep.subr.mxu0 0.0
    %61 = vmatpush1.xpose.msra.mxu0 0.0
    %62 = vmatprep.subr.mxu0 0.0
    %63 = vmatpush1.xpose.msra.mxu0 0.0
    %64 = vmatprep.subr.mxu0 0.0
    %65 = vmatpush1.xpose.msra.mxu0 0.0
    %66 = vmatprep.subr.mxu0 0.0
    %67 = vmatpush1.xpose.msra.mxu0 0.0
    %68 = vmatprep.subr.mxu0 0.0
    %69 = vmatpush1.xpose.msra.mxu0 0.0
    %70 = vmatprep.subr.mxu0 0.0
    %71 = vmatpush1.xpose.msra.mxu0 0.0
    %72 = vmatprep.subr.mxu0 0.0
    %73 = vmatpush1.xpose.msra.mxu0 0.0
    %74 = vmatprep.subr.mxu0 0.0
    %75 = vmatpush1.xpose.msra.mxu0 0.0
    %76 = vmatprep.subr.mxu0 0.0
    %77 = vmatpush1.xpose.msra.mxu0 0.0
    %78 = vmatprep.subr.mxu0 0.0
    %79 = vmatpush1.xpose.msra.mxu0 0.0
    %80 = vmatprep.subr.mxu0 0.0
    %81 = vmatpush1.xpose.msra.mxu0 0.0
    %82 = vmatprep.subr.mxu0 0.0
    %83 = vmatpush1.xpose.msra.mxu0 0.0
    %84 = vmatprep.subr.mxu0 0.0
    %85 = vmatpush1.xpose.msra.mxu0 0.0
    %86 = vmatprep.subr.mxu0 0.0
    %87 = vmatpush1.xpose.msra.mxu0 0.0
    %88 = vmatprep.subr.mxu0 0.0
    %89 = vmatpush1.xpose.msra.mxu0 0.0
    %90 = vmatprep.subr.mxu0 0.0
    %91 = vmatpush1.xpose.msra.mxu0 0.0
    %92 = vmatprep.subr.mxu0 0.0
    %93 = vmatpush1.xpose.msra.mxu0 0.0
    %94 = vmatprep.subr.mxu0 0.0
    %95 = vmatpush1.xpose.msra.mxu0 0.0
    %96 = vmatprep.subr.mxu0 0.0
    %97 = vmatpush1.xpose.msra.mxu0 0.0
    %98 = vmatprep.subr.mxu0 0.0
    %99 = vmatpush1.xpose.msra.mxu0 0.0
    %100 = vmatprep.subr.mxu0 0.0
    %101 = vmatpush1.xpose.msra.mxu0 0.0
    %102 = vmatprep.subr.mxu0 0.0
    %103 = vmatpush1.xpose.msra.mxu0 0.0
    %104 = vmatprep.subr.mxu0 0.0
    %105 = vmatpush1.xpose.msra.mxu0 0.0
    %106 = vmatprep.subr.mxu0 0.0
    %107 = vmatpush1.xpose.msra.mxu0 0.0
    %108 = vmatprep.subr.mxu0 0.0
    %109 = vmatpush1.xpose.msra.mxu0 0.0
    %110 = vmatprep.subr.mxu0 0.0
    %111 = vmatpush1.xpose.msra.mxu0 0.0
    %112 = vmatprep.subr.mxu0 0.0
    %113 = vmatpush1.xpose.msra.mxu0 0.0
    %114 = vmatprep.subr.mxu0 0.0
    %115 = vmatpush1.xpose.msra.mxu0 0.0
    %116 = vmatprep.subr.mxu0 0.0
    %117 = vmatpush1.xpose.msra.mxu0 0.0
    %118 = vmatprep.subr.mxu0 0.0
    %119 = vmatpush1.xpose.msra.mxu0 0.0
    %120 = vmatprep.mubr.f32.mxu0 %v42
    %121 = vmatmul.mubr.f32.gmra.mrb[0].mxu0 %v41
    %v122 = vpop.f32.mrb[0].mxu0
    %v123 = vadd.f32 %v54, %v122
    %v124 = vpop.f32.mrb[0].mxu0
    %125 = vdwg.mxu0
    %126 = vmatprep.subr.mxu0 0.0
    %127 = vmatpush1.xpose.msra.mxu0 %v46
    %128 = vmatprep.subr.mxu0 0.0
    %129 = vmatpush1.xpose.msra.mxu0 %v49
    %130 = vmatprep.subr.mxu0 0.0
    %131 = vmatpush1.xpose.msra.mxu0 0.0
    %132 = vmatprep.subr.mxu0 0.0
    %133 = vmatpush1.xpose.msra.mxu0 0.0
    %134 = vmatprep.subr.mxu0 0.0
    %135 = vmatpush1.xpose.msra.mxu0 0.0
    %136 = vmatprep.subr.mxu0 0.0
    %137 = vmatpush1.xpose.msra.mxu0 0.0
    %138 = vmatprep.subr.mxu0 0.0
    %139 = vmatpush1.xpose.msra.mxu0 0.0
    %140 = vmatprep.subr.mxu0 0.0
    %141 = vmatpush1.xpose.msra.mxu0 0.0
    %142 = vmatprep.subr.mxu0 0.0
    %143 = vmatpush1.xpose.msra.mxu0 0.0
    %144 = vmatprep.subr.mxu0 0.0
    %145 = vmatpush1.xpose.msra.mxu0 0.0
    %146 = vmatprep.subr.mxu0 0.0
    %147 = vmatpush1.xpose.msra.mxu0 0.0
    %148 = vmatprep.subr.mxu0 0.0
    %149 = vmatpush1.xpose.msra.mxu0 0.0
    %150 = vmatprep.subr.mxu0 0.0
    %151 = vmatpush1.xpose.msra.mxu0 0.0
    %152 = vmatprep.subr.mxu0 0.0
    %153 = vmatpush1.xpose.msra.mxu0 0.0
    %154 = vmatprep.subr.mxu0 0.0
    %155 = vmatpush1.xpose.msra.mxu0 0.0
    %156 = vmatprep.subr.mxu0 0.0
    %157 = vmatpush1.xpose.msra.mxu0 0.0
    %158 = vmatprep.subr.mxu0 0.0
    %159 = vmatpush1.xpose.msra.mxu0 0.0
    %160 = vmatprep.subr.mxu0 0.0
    %161 = vmatpush1.xpose.msra.mxu0 0.0
    %162 = vmatprep.subr.mxu0 0.0
    %163 = vmatpush1.xpose.msra.mxu0 0.0
    %164 = vmatprep.subr.mxu0 0.0
    %165 = vmatpush1.xpose.msra.mxu0 0.0
    %166 = vmatprep.subr.mxu0 0.0
    %167 = vmatpush1.xpose.msra.mxu0 0.0
    %168 = vmatprep.subr.mxu0 0.0
    %169 = vmatpush1.xpose.msra.mxu0 0.0
    %170 = vmatprep.subr.mxu0 0.0
    %171 = vmatpush1.xpose.msra.mxu0 0.0
    %172 = vmatprep.subr.mxu0 0.0
    %173 = vmatpush1.xpose.msra.mxu0 0.0
    %174 = vmatprep.subr.mxu0 0.0
    %175 = vmatpush1.xpose.msra.mxu0 0.0
    %176 = vmatprep.subr.mxu0 0.0
    %177 = vmatpush1.xpose.msra.mxu0 0.0
    %178 = vmatprep.subr.mxu0 0.0
    %179 = vmatpush1.xpose.msra.mxu0 0.0
    %180 = vmatprep.subr.mxu0 0.0
    %181 = vmatpush1.xpose.msra.mxu0 0.0
    %182 = vmatprep.subr.mxu0 0.0
    %183 = vmatpush1.xpose.msra.mxu0 0.0
    %184 = vmatprep.subr.mxu0 0.0
    %185 = vmatpush1.xpose.msra.mxu0 0.0
    %186 = vmatprep.subr.mxu0 0.0
    %187 = vmatpush1.xpose.msra.mxu0 0.0
    %188 = vmatprep.subr.mxu0 0.0
    %189 = vmatpush1.xpose.msra.mxu0 0.0
    %190 = vmatprep.mubr.f32.mxu0 0.0
    %191 = vmatmul.mubr.f32.gmra.mrb[0].mxu0 %v43
    %v192 = vpop.f32.mrb[0].mxu0
    %v193 = vadd.f32 %v123, %v192
    %v194 = vpop.f32.mrb[0].mxu0
    %195 = vdwg.mxu0
    %vm196 = vcmask 128000
    %197 = vst.msk [vmem:[#allocation7] sm:$0x3f] %vm196, %v193
    // Predicated region
    $region22: #{tpu_custom_call.1} parent=1 // pred_check
      _
    $region23: #{tpu_custom_call.1} parent=1 // pred_check_branch
      %199 = sbr.rel (0) target = $region25
    $region24: #{tpu_custom_call.1} parent=1 // pred_region
      %s201 = ssub.s32 128, 128
      %202 = vsyncadd [#allocation4], %s201
      %s204 = sshll.u32 [#allocation7], 4
      %s205 = int_to_ptr.vmem [resolvable:$true] %s204
      %207 = dma.vmem_to_hbm [thread:$0]  %s205, 128, %s3, [#allocation4]
    $region25: #{tpu_custom_call.1} parent=1 // pred_fallthru
      _
    // Predicated region
    $region26: #{tpu_custom_call.1} parent=1 // pred_check
      _
    $region27: #{tpu_custom_call.1} parent=1 // pred_check_branch
      %209 = sbr.rel (0) target = $region29
    $region28: #{tpu_custom_call.1} parent=1 // pred_region
      %210 = dma.done [#allocation4], 128
    $region29: #{tpu_custom_call.1} parent=1 // pred_fallthru
      _
    %211 = vsyncpa [#allocation3], 1
    %212 = vsyncpa [#allocation6], 1
    %213 = vsyncpa [#allocation4], 1

</llo_original>
